<compile_context>
chip_gen: v5e
topology: v5e:2x2
jax: 0.10.0
libtpu: 0.0.40
codegen_flags: <defaults>
</compile_context>

<pallas_src>
import jax
import jax.numpy as jnp
from jax.experimental import pallas as pl
from jax.experimental.pallas import tpu as pltpu


def _round_up(x, m):
    return ((x + m - 1) // m) * m


def _make_kernel(P, max_fs):
    def kernel(x_ref, wc_ref, bc_ref, mask_ref,
               w1_ref, b1_ref, w2_ref, b2_ref, out_ref):
        x = x_ref[...]                                     # (TB, L_pad, E) f32
        TB, _, E = x.shape

        # im2col over max_fs taps -> (TB, P, max_fs*E): taps folded into K.
        win = jnp.concatenate([x[:, i:i + P, :] for i in range(max_fs)], axis=-1)
        win2d = win.reshape(TB * P, max_fs * E)

        # One MXU matmul covering every conv branch (lane-dense N).
        conv = jnp.dot(win2d, wc_ref[...], preferred_element_type=jnp.float32)
        conv = conv.reshape(TB, P, -1)                     # (TB, P, n_conv*nf)

        # bias + ReLU, zero the out-of-range positions, max-over-time pooling.
        conv = jnp.maximum(conv + bc_ref[...], 0.0) * mask_ref[...]
        cat = jnp.max(conv, axis=1)                        # (TB, n_conv*nf)

        # FC stack on the whole batch tile.
        # TODO(synk): nn.Dropout is identity at inference; training-mode random
        # masking is not implemented.
        h = jnp.maximum(
            jnp.dot(cat, w1_ref[...], preferred_element_type=jnp.float32)
            + b1_ref[...], 0.0)
        out = jnp.dot(h, w2_ref[...], preferred_element_type=jnp.float32) + b2_ref[...]
        out_ref[...] = out.astype(out_ref.dtype)

    return kernel


def cnn_forward(x_nchw, conv_ws, conv_bs, w_fc1, b_fc1, w_fc2, b_fc2,
                filter_sizes, block_b=128):
    """x_nchw: (B, 1, L, E) like the PyTorch module. Returns (B, output_dim)."""
    x = x_nchw[:, 0, :, :].astype(jnp.float32)             # (B, L, E)
    B, L, E = x.shape
    n_filters = conv_ws[0].shape[-1]
    n_conv = len(filter_sizes)
    NC = n_conv * n_filters
    out_dim = w_fc2.shape[1]
    max_fs = max(filter_sizes)

    # Window-position count and padded sequence length (8-aligned sublanes).
    P = _round_up(L, 8)
    L_pad = _round_up(P + max_fs - 1, 8)

    # Batch tile: multiple of 8 so output blocks are sublane-aligned.
    TB = _round_up(max(1, min(block_b, B)), 8)
    n_blocks = -(-B // TB)
    B_pad = n_blocks * TB

    # Pad batch and sequence with zeros (padded rows are masked / discarded).
    x_p = jnp.zeros((B_pad, L_pad, E), jnp.float32).at[:B, :L, :].set(x)

    # Pack all conv weights into one (max_fs*E, NC) RHS (zero-padded taps).
    w_conv = jnp.zeros((max_fs * E, NC), jnp.float32)
    for ci, (w, fs) in enumerate(zip(conv_ws, filter_sizes)):
        w_conv = w_conv.at[:fs * E, ci * n_filters:(ci + 1) * n_filters].set(
            jnp.asarray(w, jnp.float32).reshape(fs * E, n_filters))
    b_conv = jnp.concatenate(
        [jnp.asarray(b, jnp.float32).reshape(1, n_filters) for b in conv_bs], axis=1)

    # Validity mask: position p valid for branch ci iff p < L - fs_ci + 1.
    pos = jnp.arange(P, dtype=jnp.int32)[:, None]                       # (P, 1)
    limits = jnp.concatenate(
        [jnp.full((1, n_filters), L - fs + 1, jnp.int32) for fs in filter_sizes],
        axis=1)                                                         # (1, NC)
    mask = (pos < limits).astype(jnp.float32)                           # (P, NC)

    kernel = _make_kernel(P, max_fs)

    out = pl.pallas_call(
        kernel,
        out_shape=jax.ShapeDtypeStruct((B_pad, out_dim), jnp.float32),
        grid=(n_blocks,),
        in_specs=[
            pl.BlockSpec((TB, L_pad, E), lambda b: (b, 0, 0)),
            pl.BlockSpec(w_conv.shape, lambda b: (0, 0)),
            pl.BlockSpec(b_conv.shape, lambda b: (0, 0)),
            pl.BlockSpec(mask.shape, lambda b: (0, 0)),
            pl.BlockSpec(w_fc1.shape, lambda b: (0, 0)),
            pl.BlockSpec(b_fc1.shape, lambda b: (0, 0)),
            pl.BlockSpec(w_fc2.shape, lambda b: (0, 0)),
            pl.BlockSpec(b_fc2.shape, lambda b: (0, 0)),
        ],
        out_specs=pl.BlockSpec((TB, out_dim), lambda b: (b, 0)),
        compiler_params=pltpu.CompilerParams(
            dimension_semantics=("parallel",),
            vmem_limit_bytes=64 * 1024 * 1024,
        ),
    )(x_p, w_conv, b_conv, mask, w_fc1, b_fc1, w_fc2, b_fc2)
    return out[:B]


def cnn_reference(x_nchw, conv_ws, conv_bs, w_fc1, b_fc1, w_fc2, b_fc2, filter_sizes):
    """Pure-JAX reference of the PyTorch forward (eval mode)."""
    x = x_nchw[:, 0, :, :]
    B, L, E = x.shape
    pooled = []
    for w, bias, fs in zip(conv_ws, conv_bs, filter_sizes):
        l_out = L - fs + 1
        win = jnp.stack([x[:, i:i + l_out, :] for i in range(fs)], axis=2)  # (B, l_out, fs, E)
        conv = jnp.einsum("blfe,fen->bln", win, w) + bias                   # (B, l_out, nf)
        conv = jnp.maximum(conv, 0.0)
        pooled.append(jnp.max(conv, axis=1))                                # (B, nf)
    cat = jnp.concatenate(pooled, axis=1)
    h = jnp.maximum(cat @ w_fc1 + b_fc1, 0.0)
    return h @ w_fc2 + b_fc2


if __name__ == "__main__":
    # Small, module-consistent shapes.
    B, L, E = 16, 16, 32
    n_filters = 8
    filter_sizes = (2, 3, 4)
    hidden_dim = 32
    output_dim = 4

    key = jax.random.PRNGKey(0)
    keys = jax.random.split(key, 2 * len(filter_sizes) + 5)

    x = jax.random.normal(keys[0], (B, 1, L, E), jnp.float32)  # NCHW like PyTorch

    conv_ws, conv_bs = [], []
    for i, fs in enumerate(filter_sizes):
        conv_ws.append(0.1 * jax.random.normal(keys[1 + 2 * i], (fs, E, n_filters), jnp.float32))
        conv_bs.append(0.1 * jax.random.normal(keys[2 + 2 * i], (1, n_filters), jnp.float32))

    total_filters = n_filters * len(filter_sizes)
    w_fc1 = 0.1 * jax.random.normal(keys[-4], (total_filters, hidden_dim), jnp.float32)
    b_fc1 = 0.1 * jax.random.normal(keys[-3], (1, hidden_dim), jnp.float32)
    w_fc2 = 0.1 * jax.random.normal(keys[-2], (hidden_dim, output_dim), jnp.float32)
    b_fc2 = 0.1 * jax.random.normal(keys[-1], (1, output_dim), jnp.float32)

    # block_b=8 -> TB=8, two parallel grid blocks (exercises multi-block path).
    out = cnn_forward(x, conv_ws, conv_bs, w_fc1, b_fc1, w_fc2, b_fc2,
                      filter_sizes, block_b=8)
    out = jax.block_until_ready(out)

    ref = cnn_reference(x, conv_ws, conv_bs, w_fc1, b_fc1, w_fc2, b_fc2, filter_sizes)
    assert out.shape == (B, output_dim)
    assert jnp.allclose(out, ref, atol=1e-4, rtol=1e-4), "mismatch vs reference"

    print("KERNEL_OK")
</pallas_src>

<mosaic_0001>
module attributes {stable_mosaic.version = 11 : i64} {
  func.func @kernel(%arg0: i32, %arg1: memref<8x24x32xf32, #tpu.memory_space<vmem>>, %arg2: memref<128x24xf32, #tpu.memory_space<vmem>>, %arg3: memref<1x24xf32, #tpu.memory_space<vmem>>, %arg4: memref<16x24xf32, #tpu.memory_space<vmem>>, %arg5: memref<24x32xf32, #tpu.memory_space<vmem>>, %arg6: memref<1x32xf32, #tpu.memory_space<vmem>>, %arg7: memref<32x4xf32, #tpu.memory_space<vmem>>, %arg8: memref<1x4xf32, #tpu.memory_space<vmem>>, %arg9: memref<8x4xf32, #tpu.memory_space<vmem>>) attributes {dimension_semantics = [#tpu.dimension_semantics<parallel>], iteration_bounds = array<i64: 2>, scalar_prefetch = 0 : i64, scratch_operands = 0 : i64, tpu.core_type = #tpu.core_type<tc>, window_params = [{transform_indices = @transform_0, window_bounds = array<i64: 8, 24, 32>}, {pipeline_mode = #tpu.pipeline_mode<synchronous>, transform_indices = @transform_1, window_bounds = array<i64: 128, 24>}, {pipeline_mode = #tpu.pipeline_mode<synchronous>, transform_indices = @transform_2, window_bounds = array<i64: 1, 24>}, {pipeline_mode = #tpu.pipeline_mode<synchronous>, transform_indices = @transform_3, window_bounds = array<i64: 16, 24>}, {pipeline_mode = #tpu.pipeline_mode<synchronous>, transform_indices = @transform_4, window_bounds = array<i64: 24, 32>}, {pipeline_mode = #tpu.pipeline_mode<synchronous>, transform_indices = @transform_5, window_bounds = array<i64: 1, 32>}, {pipeline_mode = #tpu.pipeline_mode<synchronous>, transform_indices = @transform_6, window_bounds = array<i64: 32, 4>}, {pipeline_mode = #tpu.pipeline_mode<synchronous>, transform_indices = @transform_7, window_bounds = array<i64: 1, 4>}, {transform_indices = @transform_8, window_bounds = array<i64: 8, 4>}]} {
    %c0 = arith.constant 0 : index
    %c0_0 = arith.constant 0 : index
    %c0_1 = arith.constant 0 : index
    %0 = vector.load %arg1[%c0, %c0_0, %c0_1] : memref<8x24x32xf32, #tpu.memory_space<vmem>>, vector<8x24x32xf32>
    %1 = vector.extract_strided_slice %0 {offsets = [0, 0, 0], sizes = [8, 16, 32], strides = [1, 1, 1]} : vector<8x24x32xf32> to vector<8x16x32xf32>
    %2 = vector.extract_strided_slice %0 {offsets = [0, 1, 0], sizes = [8, 16, 32], strides = [1, 1, 1]} : vector<8x24x32xf32> to vector<8x16x32xf32>
    %3 = vector.extract_strided_slice %0 {offsets = [0, 2, 0], sizes = [8, 16, 32], strides = [1, 1, 1]} : vector<8x24x32xf32> to vector<8x16x32xf32>
    %4 = vector.extract_strided_slice %0 {offsets = [0, 3, 0], sizes = [8, 16, 32], strides = [1, 1, 1]} : vector<8x24x32xf32> to vector<8x16x32xf32>
    %5 = tpu.concatenate %1, %2, %3, %4 in 2 : vector<8x16x32xf32>, vector<8x16x32xf32>, vector<8x16x32xf32>, vector<8x16x32xf32> -> vector<8x16x128xf32>
    %6 = vector.shape_cast %5 : vector<8x16x128xf32> to vector<128x128xf32>
    %c0_2 = arith.constant 0 : index
    %c0_3 = arith.constant 0 : index
    %7 = vector.load %arg2[%c0_2, %c0_3] : memref<128x24xf32, #tpu.memory_space<vmem>>, vector<128x24xf32>
    %cst = arith.constant dense<0.000000e+00> : vector<128x24xf32>
    %8 = tpu.matmul %6, %7, %cst {dimension_numbers = #tpu.dot_dimension_numbers<[1], [0], [0], [1], [0, 0, 1, 1], [], []>} : vector<128x128xf32>, vector<128x24xf32>, vector<128x24xf32> -> vector<128x24xf32>
    %9 = vector.shape_cast %8 : vector<128x24xf32> to vector<8x16x24xf32>
    %c0_4 = arith.constant 0 : index
    %c0_5 = arith.constant 0 : index
    %10 = vector.load %arg3[%c0_4, %c0_5] : memref<1x24xf32, #tpu.memory_space<vmem>>, vector<1x24xf32>
    %11 = vector.shape_cast %10 : vector<1x24xf32> to vector<1x1x24xf32>
    %12 = vector.broadcast %11 : vector<1x1x24xf32> to vector<8x16x24xf32>
    %13 = arith.addf %9, %12 : vector<8x16x24xf32>
    %cst_6 = arith.constant 0.000000e+00 : f32
    %14 = vector.broadcast %cst_6 : f32 to vector<8x16x24xf32>
    %15 = arith.maximumf %13, %14 : vector<8x16x24xf32>
    %c0_7 = arith.constant 0 : index
    %c0_8 = arith.constant 0 : index
    %16 = vector.load %arg4[%c0_7, %c0_8] : memref<16x24xf32, #tpu.memory_space<vmem>>, vector<16x24xf32>
    %17 = vector.shape_cast %16 : vector<16x24xf32> to vector<1x16x24xf32>
    %18 = vector.broadcast %17 : vector<1x16x24xf32> to vector<8x16x24xf32>
    %19 = arith.mulf %15, %18 : vector<8x16x24xf32>
    %cst_9 = arith.constant dense<0xFF800000> : vector<8x24xf32>
    %20 = vector.multi_reduction <maximumf>, %19, %cst_9 [1] : vector<8x16x24xf32> to vector<8x24xf32>
    %c0_10 = arith.constant 0 : index
    %c0_11 = arith.constant 0 : index
    %21 = vector.load %arg5[%c0_10, %c0_11] : memref<24x32xf32, #tpu.memory_space<vmem>>, vector<24x32xf32>
    %cst_12 = arith.constant dense<0.000000e+00> : vector<8x32xf32>
    %22 = tpu.matmul %20, %21, %cst_12 {dimension_numbers = #tpu.dot_dimension_numbers<[1], [0], [0], [1], [0, 0, 1, 1], [], []>} : vector<8x24xf32>, vector<24x32xf32>, vector<8x32xf32> -> vector<8x32xf32>
    %c0_13 = arith.constant 0 : index
    %c0_14 = arith.constant 0 : index
    %23 = vector.load %arg6[%c0_13, %c0_14] : memref<1x32xf32, #tpu.memory_space<vmem>>, vector<1x32xf32>
    %24 = vector.broadcast %23 : vector<1x32xf32> to vector<8x32xf32>
    %25 = arith.addf %22, %24 : vector<8x32xf32>
    %cst_15 = arith.constant 0.000000e+00 : f32
    %26 = vector.broadcast %cst_15 : f32 to vector<8x32xf32>
    %27 = arith.maximumf %25, %26 : vector<8x32xf32>
    %c0_16 = arith.constant 0 : index
    %c0_17 = arith.constant 0 : index
    %28 = vector.load %arg7[%c0_16, %c0_17] : memref<32x4xf32, #tpu.memory_space<vmem>>, vector<32x4xf32>
    %cst_18 = arith.constant dense<0.000000e+00> : vector<8x4xf32>
    %29 = tpu.matmul %27, %28, %cst_18 {dimension_numbers = #tpu.dot_dimension_numbers<[1], [0], [0], [1], [0, 0, 1, 1], [], []>} : vector<8x32xf32>, vector<32x4xf32>, vector<8x4xf32> -> vector<8x4xf32>
    %c0_19 = arith.constant 0 : index
    %c0_20 = arith.constant 0 : index
    %30 = vector.load %arg8[%c0_19, %c0_20] : memref<1x4xf32, #tpu.memory_space<vmem>>, vector<1x4xf32>
    %31 = vector.broadcast %30 : vector<1x4xf32> to vector<8x4xf32>
    %32 = arith.addf %29, %31 : vector<8x4xf32>
    %c0_21 = arith.constant 0 : index
    %c0_22 = arith.constant 0 : index
    %33 = vector.load %arg9[%c0_21, %c0_22] : memref<8x4xf32, #tpu.memory_space<vmem>>, vector<8x4xf32>
    tpu.vector_store %arg9[%c0_21, %c0_22], %32 {strides = array<i32>} : memref<8x4xf32, #tpu.memory_space<vmem>>, vector<8x4xf32>,
    return
  }
  func.func @transform_0(%arg0: i32) -> (i32, i32, i32) {
    %c0_i32 = arith.constant 0 : i32
    %c0_i32_0 = arith.constant 0 : i32
    %c0_i32_1 = arith.constant 0 : i32
    return %arg0, %c0_i32, %c0_i32_0 : i32, i32, i32
  }
  func.func @transform_1(%arg0: i32) -> (i32, i32) {
    %c0_i32 = arith.constant 0 : i32
    %c0_i32_0 = arith.constant 0 : i32
    %c0_i32_1 = arith.constant 0 : i32
    return %c0_i32, %c0_i32_0 : i32, i32
  }
  func.func @transform_2(%arg0: i32) -> (i32, i32) {
    %c0_i32 = arith.constant 0 : i32
    %c0_i32_0 = arith.constant 0 : i32
    %c0_i32_1 = arith.constant 0 : i32
    return %c0_i32, %c0_i32_0 : i32, i32
  }
  func.func @transform_3(%arg0: i32) -> (i32, i32) {
    %c0_i32 = arith.constant 0 : i32
    %c0_i32_0 = arith.constant 0 : i32
    %c0_i32_1 = arith.constant 0 : i32
    return %c0_i32, %c0_i32_0 : i32, i32
  }
  func.func @transform_4(%arg0: i32) -> (i32, i32) {
    %c0_i32 = arith.constant 0 : i32
    %c0_i32_0 = arith.constant 0 : i32
    %c0_i32_1 = arith.constant 0 : i32
    return %c0_i32, %c0_i32_0 : i32, i32
  }
  func.func @transform_5(%arg0: i32) -> (i32, i32) {
    %c0_i32 = arith.constant 0 : i32
    %c0_i32_0 = arith.constant 0 : i32
    %c0_i32_1 = arith.constant 0 : i32
    return %c0_i32, %c0_i32_0 : i32, i32
  }
  func.func @transform_6(%arg0: i32) -> (i32, i32) {
    %c0_i32 = arith.constant 0 : i32
    %c0_i32_0 = arith.constant 0 : i32
    %c0_i32_1 = arith.constant 0 : i32
    return %c0_i32, %c0_i32_0 : i32, i32
  }
  func.func @transform_7(%arg0: i32) -> (i32, i32) {
    %c0_i32 = arith.constant 0 : i32
    %c0_i32_0 = arith.constant 0 : i32
    %c0_i32_1 = arith.constant 0 : i32
    return %c0_i32, %c0_i32_0 : i32, i32
  }
  func.func @transform_8(%arg0: i32) -> (i32, i32) {
    %c0_i32 = arith.constant 0 : i32
    %c0_i32_0 = arith.constant 0 : i32
    return %arg0, %c0_i32 : i32, i32
  }
}

</mosaic_0001>

<llo_original>
// kernel: tpu_custom_call.1
$region0: #{tpu_custom_call.1}
  #allocation0 [shape = 'u32[]', space=smem, size = 0x4, offset = 0x4, fixed_abs, tag = 'smem constant byte address 0x4 - core index']
  #allocation1 [shape = 'u32[72,128]{1,0:T(1,128)}', space=vmem, size = 0x9000, scoped, tag = 'internal scratch']
  %s0 = inlined_call_operand.hbm [shape: f32[16,24,32], index: 0, kind: input, shape index: {}]
  %s1 = inlined_call_operand.vmem [shape: f32[128,24], index: 1, kind: input, shape index: {}]
  %s2 = inlined_call_operand.vmem [shape: f32[1,24], index: 2, kind: input, shape index: {}]
  %s3 = inlined_call_operand.vmem [shape: f32[16,24], index: 3, kind: input, shape index: {}]
  %s4 = inlined_call_operand.vmem [shape: f32[24,32], index: 4, kind: input, shape index: {}]
  %s5 = inlined_call_operand.vmem [shape: f32[1,32], index: 5, kind: input, shape index: {}]
  %s6 = inlined_call_operand.vmem [shape: f32[32,4], index: 6, kind: input, shape index: {}]
  %s7 = inlined_call_operand.vmem [shape: f32[1,4], index: 7, kind: input, shape index: {}]
  %s8 = inlined_call_operand.vmem [shape: f32[16,4], index: 8, kind: output, shape index: {}]
  %s9 = sld [smem:[#allocation0]]
  $region69: #{tpu_custom_call.1} parent=0
    _
  %s11 = ssub.s32 1, %s9
  %s12 = scalar_select 0, %s11, %s9
  $region1: #{tpu_custom_call.1} parent=0
    #allocation2 [shape = 'u8[196608]{0}', space=vmem, size = 0x30000, scoped, tag = 'input window, operand 0']
    #allocation3 [shape = 's32[2]{0}', space=sflag, size = 0x8, scoped, tag = 'scoped memory for tpu_custom_call.1']
    %13 = vsyncpa [#allocation3], 0
    %s14 = scalar_lea.sflag [#allocation3], 1
    %15 = vsyncpa %s14, 0
    loop: start=0, step=1, limit=4
    $region2: #{tpu_custom_call.1} parent=1 // loop_pre_header
      _
    $region3: #{tpu_custom_call.1} parent=1 // loop_header
      %s17 = sphi 0, %s21
      %p18 = scmp.ge.s32.totalorder %s17, 4
      %s27 = sphi 0, %s29
      %s30 = sphi 0, %s27
      %s31 = sphi 0, %s30
      %s47 = sphi 0, %s31
      %s51 = sphi 0, %s51
      %s53 = sphi 0, %s51
      %s54 = sphi 0, %s53
      %s68 = sphi 0, %s54
      %s72 = sphi 0, %s72
      %s74 = sphi 0, %s72
      %s75 = sphi 0, %s74
      %s89 = sphi 0, %s75
      %s93 = sphi 0, %s93
      %s95 = sphi 0, %s93
      %s96 = sphi 0, %s95
      %s110 = sphi 0, %s96
      %s114 = sphi 0, %s114
      %s116 = sphi 0, %s114
      %s117 = sphi 0, %s116
      %s131 = sphi 0, %s117
      %s135 = sphi 0, %s135
      %s137 = sphi 0, %s135
      %s138 = sphi 0, %s137
      %s152 = sphi 0, %s138
      %s156 = sphi 0, %s156
      %s158 = sphi 0, %s156
      %s159 = sphi 0, %s158
      %s173 = sphi 0, %s159
      %s177 = sphi 0, %s177
      %s179 = sphi 0, %s177
      %s180 = sphi 0, %s179
      %s194 = sphi 0, %s180
      %s200 = sphi 0, %s202
      %s203 = sphi 0, %s200
      %s204 = sphi 0, %s203
      %s220 = sphi 0, %s204
    $region4: #{tpu_custom_call.1} parent=1 // loop_header_branch
      %20 = sbr.rel (%p18) target = $region8
    $region5: #{tpu_custom_call.1} parent=1 // loop_body
      %s22 = ssub.s32 %s17, 1
      %s23 = ssub.s32 %s17, 2
      %s24 = sadd.s32 %s17, 1
      %s25 = ssub.s32 %s17, %s24
      %p26 = scmp.eq.s32.totalorder %s25, 0
      %s28 = sadd.s32 %s27, 1
      %s29 = scalar_select %p26, %s27, %s28
      %p32 = pneg %p26
      %p33 = scmp.eq.s32.totalorder %s17, 1
      %p34 = por %p32, %p33
      %p35 = scmp.ne.s32.totalorder %s27, %s30
      %p36 = scmp.eq.s32.totalorder %s17, 0
      %p37 = por %p35, %p36
      %p38 = scmp.ne.s32.totalorder %s27, %s30
      %p39 = scmp.eq.s32.totalorder %s22, 1
      %p40 = por %p38, %p39
      %p41 = scmp.ne.s32.totalorder %s30, %s31
      %p42 = scmp.eq.s32.totalorder %s22, 0
      %p43 = por %p41, %p42
      %p44 = scmp.ne.s32.totalorder %s30, %s31
      %p45 = scmp.eq.s32.totalorder %s23, 1
      %p46 = por %p44, %p45
      %p48 = scmp.ne.s32.totalorder %s31, %s47
      %p49 = scmp.eq.s32.totalorder %s23, 0
      %p50 = por %p48, %p49
      %s52 = sadd.s32 %s51, 1
      %p55 = scmp.eq.s32.totalorder %s17, 1
      %p56 = scmp.ne.s32.totalorder %s51, %s53
      %p57 = scmp.eq.s32.totalorder %s17, 0
      %p58 = por %p56, %p57
      %p59 = scmp.ne.s32.totalorder %s51, %s53
      %p60 = scmp.eq.s32.totalorder %s22, 1
      %p61 = por %p59, %p60
      %p62 = scmp.ne.s32.totalorder %s53, %s54
      %p63 = scmp.eq.s32.totalorder %s22, 0
      %p64 = por %p62, %p63
      %p65 = scmp.ne.s32.totalorder %s53, %s54
      %p66 = scmp.eq.s32.totalorder %s23, 1
      %p67 = por %p65, %p66
      %p69 = scmp.ne.s32.totalorder %s54, %s68
      %p70 = scmp.eq.s32.totalorder %s23, 0
      %p71 = por %p69, %p70
      %s73 = sadd.s32 %s72, 1
      %p76 = scmp.eq.s32.totalorder %s17, 1
      %p77 = scmp.ne.s32.totalorder %s72, %s74
      %p78 = scmp.eq.s32.totalorder %s17, 0
      %p79 = por %p77, %p78
      %p80 = scmp.ne.s32.totalorder %s72, %s74
      %p81 = scmp.eq.s32.totalorder %s22, 1
      %p82 = por %p80, %p81
      %p83 = scmp.ne.s32.totalorder %s74, %s75
      %p84 = scmp.eq.s32.totalorder %s22, 0
      %p85 = por %p83, %p84
      %p86 = scmp.ne.s32.totalorder %s74, %s75
      %p87 = scmp.eq.s32.totalorder %s23, 1
      %p88 = por %p86, %p87
      %p90 = scmp.ne.s32.totalorder %s75, %s89
      %p91 = scmp.eq.s32.totalorder %s23, 0
      %p92 = por %p90, %p91
      %s94 = sadd.s32 %s93, 1
      %p97 = scmp.eq.s32.totalorder %s17, 1
      %p98 = scmp.ne.s32.totalorder %s93, %s95
      %p99 = scmp.eq.s32.totalorder %s17, 0
      %p100 = por %p98, %p99
      %p101 = scmp.ne.s32.totalorder %s93, %s95
      %p102 = scmp.eq.s32.totalorder %s22, 1
      %p103 = por %p101, %p102
      %p104 = scmp.ne.s32.totalorder %s95, %s96
      %p105 = scmp.eq.s32.totalorder %s22, 0
      %p106 = por %p104, %p105
      %p107 = scmp.ne.s32.totalorder %s95, %s96
      %p108 = scmp.eq.s32.totalorder %s23, 1
      %p109 = por %p107, %p108
      %p111 = scmp.ne.s32.totalorder %s96, %s110
      %p112 = scmp.eq.s32.totalorder %s23, 0
      %p113 = por %p111, %p112
      %s115 = sadd.s32 %s114, 1
      %p118 = scmp.eq.s32.totalorder %s17, 1
      %p119 = scmp.ne.s32.totalorder %s114, %s116
      %p120 = scmp.eq.s32.totalorder %s17, 0
      %p121 = por %p119, %p120
      %p122 = scmp.ne.s32.totalorder %s114, %s116
      %p123 = scmp.eq.s32.totalorder %s22, 1
      %p124 = por %p122, %p123
      %p125 = scmp.ne.s32.totalorder %s116, %s117
      %p126 = scmp.eq.s32.totalorder %s22, 0
      %p127 = por %p125, %p126
      %p128 = scmp.ne.s32.totalorder %s116, %s117
      %p129 = scmp.eq.s32.totalorder %s23, 1
      %p130 = por %p128, %p129
      %p132 = scmp.ne.s32.totalorder %s117, %s131
      %p133 = scmp.eq.s32.totalorder %s23, 0
      %p134 = por %p132, %p133
      %s136 = sadd.s32 %s135, 1
      %p139 = scmp.eq.s32.totalorder %s17, 1
      %p140 = scmp.ne.s32.totalorder %s135, %s137
      %p141 = scmp.eq.s32.totalorder %s17, 0
      %p142 = por %p140, %p141
      %p143 = scmp.ne.s32.totalorder %s135, %s137
      %p144 = scmp.eq.s32.totalorder %s22, 1
      %p145 = por %p143, %p144
      %p146 = scmp.ne.s32.totalorder %s137, %s138
      %p147 = scmp.eq.s32.totalorder %s22, 0
      %p148 = por %p146, %p147
      %p149 = scmp.ne.s32.totalorder %s137, %s138
      %p150 = scmp.eq.s32.totalorder %s23, 1
      %p151 = por %p149, %p150
      %p153 = scmp.ne.s32.totalorder %s138, %s152
      %p154 = scmp.eq.s32.totalorder %s23, 0
      %p155 = por %p153, %p154
      %s157 = sadd.s32 %s156, 1
      %p160 = scmp.eq.s32.totalorder %s17, 1
      %p161 = scmp.ne.s32.totalorder %s156, %s158
      %p162 = scmp.eq.s32.totalorder %s17, 0
      %p163 = por %p161, %p162
      %p164 = scmp.ne.s32.totalorder %s156, %s158
      %p165 = scmp.eq.s32.totalorder %s22, 1
      %p166 = por %p164, %p165
      %p167 = scmp.ne.s32.totalorder %s158, %s159
      %p168 = scmp.eq.s32.totalorder %s22, 0
      %p169 = por %p167, %p168
      %p170 = scmp.ne.s32.totalorder %s158, %s159
      %p171 = scmp.eq.s32.totalorder %s23, 1
      %p172 = por %p170, %p171
      %p174 = scmp.ne.s32.totalorder %s159, %s173
      %p175 = scmp.eq.s32.totalorder %s23, 0
      %p176 = por %p174, %p175
      %s178 = sadd.s32 %s177, 1
      %p181 = scmp.eq.s32.totalorder %s17, 1
      %p182 = scmp.ne.s32.totalorder %s177, %s179
      %p183 = scmp.eq.s32.totalorder %s17, 0
      %p184 = por %p182, %p183
      %p185 = scmp.ne.s32.totalorder %s177, %s179
      %p186 = scmp.eq.s32.totalorder %s22, 1
      %p187 = por %p185, %p186
      %p188 = scmp.ne.s32.totalorder %s179, %s180
      %p189 = scmp.eq.s32.totalorder %s22, 0
      %p190 = por %p188, %p189
      %p191 = scmp.ne.s32.totalorder %s179, %s180
      %p192 = scmp.eq.s32.totalorder %s23, 1
      %p193 = por %p191, %p192
      %p195 = scmp.ne.s32.totalorder %s180, %s194
      %p196 = scmp.eq.s32.totalorder %s23, 0
      %p197 = por %p195, %p196
      %s198 = ssub.s32 %s17, %s24
      %p199 = scmp.eq.s32.totalorder %s198, 0
      %s201 = sadd.s32 %s200, 1
      %s202 = scalar_select %p199, %s200, %s201
      %p205 = pneg %p199
      %p206 = scmp.eq.s32.totalorder %s17, 1
      %p207 = por %p205, %p206
      %p208 = scmp.ne.s32.totalorder %s200, %s203
      %p209 = scmp.eq.s32.totalorder %s17, 0
      %p210 = por %p208, %p209
      %p211 = scmp.ne.s32.totalorder %s200, %s203
      %p212 = scmp.eq.s32.totalorder %s22, 1
      %p213 = por %p211, %p212
      %p214 = scmp.ne.s32.totalorder %s203, %s204
      %p215 = scmp.eq.s32.totalorder %s22, 0
      %p216 = por %p214, %p215
      %p217 = scmp.ne.s32.totalorder %s203, %s204
      %p218 = scmp.eq.s32.totalorder %s23, 1
      %p219 = por %p217, %p218
      %p221 = scmp.ne.s32.totalorder %s204, %s220
      %p222 = scmp.eq.s32.totalorder %s23, 0
      %p223 = por %p221, %p222
      %p224 = scmp.le.s32.totalorder 1, %s17
      %p225 = scmp.lt.s32.totalorder %s17, 3
      %p226 = pnand %p224, %p225
      %p227 = pneg %p226
      // Predicated region
      $region9: #{tpu_custom_call.1} parent=5 // pred_check
        _
      $region10: #{tpu_custom_call.1} parent=5 // pred_check_branch
        %229 = sbr.rel (%p226) target = $region12
      $region11: #{tpu_custom_call.1} parent=5 // pred_region
        %s230 = ssub.s32 %s17, 1
        // Predicated region
        $region13: #{tpu_custom_call.1} parent=11 // pred_check
          %p231 = pneg %p64
        $region14: #{tpu_custom_call.1} parent=11 // pred_check_branch
          %233 = sbr.rel (%p231) target = $region16
        $region15: #{tpu_custom_call.1} parent=11 // pred_region
          _
        $region16: #{tpu_custom_call.1} parent=11 // pred_fallthru
          _
        // Predicated region
        $region17: #{tpu_custom_call.1} parent=11 // pred_check
          %p234 = pneg %p85
        $region18: #{tpu_custom_call.1} parent=11 // pred_check_branch
          %236 = sbr.rel (%p234) target = $region20
        $region19: #{tpu_custom_call.1} parent=11 // pred_region
          _
        $region20: #{tpu_custom_call.1} parent=11 // pred_fallthru
          _
        // Predicated region
        $region21: #{tpu_custom_call.1} parent=11 // pred_check
          %p237 = pneg %p106
        $region22: #{tpu_custom_call.1} parent=11 // pred_check_branch
          %239 = sbr.rel (%p237) target = $region24
        $region23: #{tpu_custom_call.1} parent=11 // pred_region
          _
        $region24: #{tpu_custom_call.1} parent=11 // pred_fallthru
          _
        // Predicated region
        $region25: #{tpu_custom_call.1} parent=11 // pred_check
          %p240 = pneg %p127
        $region26: #{tpu_custom_call.1} parent=11 // pred_check_branch
          %242 = sbr.rel (%p240) target = $region28
        $region27: #{tpu_custom_call.1} parent=11 // pred_region
          _
        $region28: #{tpu_custom_call.1} parent=11 // pred_fallthru
          _
        // Predicated region
        $region29: #{tpu_custom_call.1} parent=11 // pred_check
          %p243 = pneg %p148
        $region30: #{tpu_custom_call.1} parent=11 // pred_check_branch
          %245 = sbr.rel (%p243) target = $region32
        $region31: #{tpu_custom_call.1} parent=11 // pred_region
          _
        $region32: #{tpu_custom_call.1} parent=11 // pred_fallthru
          _
        // Predicated region
        $region33: #{tpu_custom_call.1} parent=11 // pred_check
          %p246 = pneg %p169
        $region34: #{tpu_custom_call.1} parent=11 // pred_check_branch
          %248 = sbr.rel (%p246) target = $region36
        $region35: #{tpu_custom_call.1} parent=11 // pred_region
          _
        $region36: #{tpu_custom_call.1} parent=11 // pred_fallthru
          _
        // Predicated region
        $region37: #{tpu_custom_call.1} parent=11 // pred_check
          %p249 = pneg %p190
        $region38: #{tpu_custom_call.1} parent=11 // pred_check_branch
          %251 = sbr.rel (%p249) target = $region40
        $region39: #{tpu_custom_call.1} parent=11 // pred_region
          _
        $region40: #{tpu_custom_call.1} parent=11 // pred_fallthru
          _
      $region12: #{tpu_custom_call.1} parent=5 // pred_fallthru
        _
      %p252 = scmp.lt.s32.totalorder %s17, 2
      // Predicated region
      $region41: #{tpu_custom_call.1} parent=5 // pred_check
        %p253 = pneg %p252
      $region42: #{tpu_custom_call.1} parent=5 // pred_check_branch
        %255 = sbr.rel (%p253) target = $region44
      $region43: #{tpu_custom_call.1} parent=5 // pred_region
        // Predicated region
        $region45: #{tpu_custom_call.1} parent=43 // pred_check
          %p256 = pneg %p37
        $region46: #{tpu_custom_call.1} parent=43 // pred_check_branch
          %258 = sbr.rel (%p256) target = $region48
        $region47: #{tpu_custom_call.1} parent=43 // pred_region
          %s259 = sand.u32 %s27, 1
          %s260 = scalar_lea.sflag [#allocation3], %s259
          %s261 = sand.u32 %s27, 1
          %s262 = smul.addr %s261, 192
          %s263 = scalar_lea.vmem [#allocation2], %s262
          %s264 = smul.u32 8, %s17
          %266 = vsyncadd %s260, 0
          %s267 = smul.addr %s264, 3
          %s268 = smul.addr %s267, 8
          %s269 = scalar_lea.hbm %s0, %s268
          %s270 = sshll.u32 %s269, 4
          %s271 = int_to_ptr.hbm [resolvable:$true] %s270
          %s272 = sshll.u32 %s263, 4
          %s273 = int_to_ptr.vmem [resolvable:$true] %s272
          %278 = dma.hbm_to_vmem [thread:$0]  %s271, 3072, %s273, %s260, 128, 128, 8
        $region48: #{tpu_custom_call.1} parent=43 // pred_fallthru
          _
      $region44: #{tpu_custom_call.1} parent=5 // pred_fallthru
        _
      %p279 = scmp.le.s32.totalorder 1, %s17
      %p280 = scmp.lt.s32.totalorder %s17, 3
      %p281 = pnand %p279, %p280
      %p282 = pneg %p281
      // Predicated region
      $region49: #{tpu_custom_call.1} parent=5 // pred_check
        _
      $region50: #{tpu_custom_call.1} parent=5 // pred_check_branch
        %284 = sbr.rel (%p281) target = $region52
      $region51: #{tpu_custom_call.1} parent=5 // pred_region
        %s285 = ssub.s32 %s17, 1
        %s286 = sand.u32 %s30, 1
        %s287 = scalar_lea.sflag [#allocation3], %s286
        %s288 = sand.u32 %s30, 1
        %s289 = smul.addr %s288, 192
        %s290 = scalar_lea.vmem [#allocation2], %s289
        // Predicated region
        $region53: #{tpu_custom_call.1} parent=51 // pred_check
          %p291 = pneg %p43
        $region54: #{tpu_custom_call.1} parent=51 // pred_check_branch
          %293 = sbr.rel (%p291) target = $region56
        $region55: #{tpu_custom_call.1} parent=51 // pred_region
          %295 = dma.done %s287, 3072
        $region56: #{tpu_custom_call.1} parent=51 // pred_fallthru
          _
        %s296 = sand.u32 %s30, 1
        %s297 = scalar_lea.sflag [#allocation3], %s296
        %s298 = sand.u32 %s30, 1
        %s299 = smul.addr %s298, 192
        %s300 = scalar_lea.vmem [#allocation2], %s299
        %p301 = pneg %p43
        %p302 = pneg %p40
        %p303 = pneg %p64
        %p304 = pneg %p61
        %p305 = pneg %p85
        %p306 = pneg %p82
        %p307 = pneg %p106
        %p308 = pneg %p103
        %p309 = pneg %p127
        %p310 = pneg %p124
        %p311 = pneg %p148
        %p312 = pneg %p145
        %p313 = pneg %p169
        %p314 = pneg %p166
        %p315 = pneg %p190
        %p316 = pneg %p187
        %p317 = pneg %p216
        %p318 = pneg %p213
        %p319 = scmp.lt.s32.totalorder %s22, 1
        %s320 = scalar_select %p319, %s22, 1
        %s321 = smul.addr %s320, 8
        %s322 = scalar_lea.vmem %s8, %s321
        %s323 = smul.u32 8, %s22
        %p324 = scmp.lt.s32.totalorder %s22, 1
        %s325 = scalar_select %p324, %s22, 1
        %s326 = smul.addr %s325, 8
        %s327 = scalar_lea.vmem %s8, %s326
        %v328 = vld [vmem:[%s290] sm:$0xff]
        %v329 = vld [vmem:[%s290 + $0x8] sm:$0xff]
        %v330 = vld [vmem:[%s290 + $0x10] sm:$0xff]
        %v331 = vld [vmem:[%s290 + $0x18] sm:$0xff]
        %v332 = vld [vmem:[%s290 + $0x20] sm:$0xff]
        %v333 = vld [vmem:[%s290 + $0x28] sm:$0xff]
        %v334 = vld [vmem:[%s290 + $0x30] sm:$0xff]
        %v335 = vld [vmem:[%s290 + $0x38] sm:$0xff]
        %v336 = vld [vmem:[%s290 + $0x40] sm:$0xff]
        %v337 = vld [vmem:[%s290 + $0x48] sm:$0xff]
        %v338 = vld [vmem:[%s290 + $0x50] sm:$0xff]
        %v339 = vld [vmem:[%s290 + $0x58] sm:$0xff]
        %v340 = vld [vmem:[%s290 + $0x60] sm:$0xff]
        %v341 = vld [vmem:[%s290 + $0x68] sm:$0xff]
        %v342 = vld [vmem:[%s290 + $0x70] sm:$0xff]
        %v343 = vld [vmem:[%s290 + $0x78] sm:$0xff]
        %v344 = vld [vmem:[%s290 + $0x80] sm:$0xff]
        %v345 = vld [vmem:[%s290 + $0x88] sm:$0xff]
        %v346 = vld [vmem:[%s290 + $0x90] sm:$0xff]
        %v347 = vld [vmem:[%s290 + $0x98] sm:$0xff]
        %v348 = vld [vmem:[%s290 + $0xa0] sm:$0xff]
        %v349 = vld [vmem:[%s290 + $0xa8] sm:$0xff]
        %v350 = vld [vmem:[%s290 + $0xb0] sm:$0xff]
        %v351 = vld [vmem:[%s290 + $0xb8] sm:$0xff]
        %vm376 = vcmask 1046528
        %v377 = vrot.slane %v328, 1
        %v378 = vrot.slane %v329, 1
        %v379 = vsel %vm376, %v377, %v378
        %v380 = vrot.slane %v330, 1
        %v381 = vsel %vm376, %v378, %v380
        %v382 = vrot.slane %v331, 1
        %v383 = vrot.slane %v332, 1
        %v384 = vsel %vm376, %v382, %v383
        %v385 = vrot.slane %v333, 1
        %v386 = vsel %vm376, %v383, %v385
        %v387 = vrot.slane %v334, 1
        %v388 = vrot.slane %v335, 1
        %v389 = vsel %vm376, %v387, %v388
        %v390 = vrot.slane %v336, 1
        %v391 = vsel %vm376, %v388, %v390
        %v392 = vrot.slane %v337, 1
        %v393 = vrot.slane %v338, 1
        %v394 = vsel %vm376, %v392, %v393
        %v395 = vrot.slane %v339, 1
        %v396 = vsel %vm376, %v393, %v395
        %v397 = vrot.slane %v340, 1
        %v398 = vrot.slane %v341, 1
        %v399 = vsel %vm376, %v397, %v398
        %v400 = vrot.slane %v342, 1
        %v401 = vsel %vm376, %v398, %v400
        %v402 = vrot.slane %v343, 1
        %v403 = vrot.slane %v344, 1
        %v404 = vsel %vm376, %v402, %v403
        %v405 = vrot.slane %v345, 1
        %v406 = vsel %vm376, %v403, %v405
        %v407 = vrot.slane %v346, 1
        %v408 = vrot.slane %v347, 1
        %v409 = vsel %vm376, %v407, %v408
        %v410 = vrot.slane %v348, 1
        %v411 = vsel %vm376, %v408, %v410
        %v412 = vrot.slane %v349, 1
        %v413 = vrot.slane %v350, 1
        %v414 = vsel %vm376, %v412, %v413
        %v415 = vrot.slane %v351, 1
        %v416 = vsel %vm376, %v413, %v415
        %417 = vrot.lane.b32.xlu0 %v379, 32
        %v418 = vpop.permute.xlu0 %417
        %419 = vrot.lane.b32.xlu0 %v381, 32
        %v420 = vpop.permute.xlu0 %419
        %421 = vrot.lane.b32.xlu0 %v384, 32
        %v422 = vpop.permute.xlu0 %421
        %423 = vrot.lane.b32.xlu0 %v386, 32
        %v424 = vpop.permute.xlu0 %423
        %425 = vrot.lane.b32.xlu0 %v389, 32
        %v426 = vpop.permute.xlu0 %425
        %427 = vrot.lane.b32.xlu0 %v391, 32
        %v428 = vpop.permute.xlu0 %427
        %429 = vrot.lane.b32.xlu0 %v394, 32
        %v430 = vpop.permute.xlu0 %429
        %431 = vrot.lane.b32.xlu0 %v396, 32
        %v432 = vpop.permute.xlu0 %431
        %433 = vrot.lane.b32.xlu0 %v399, 32
        %v434 = vpop.permute.xlu0 %433
        %435 = vrot.lane.b32.xlu0 %v401, 32
        %v436 = vpop.permute.xlu0 %435
        %437 = vrot.lane.b32.xlu0 %v404, 32
        %v438 = vpop.permute.xlu0 %437
        %439 = vrot.lane.b32.xlu0 %v406, 32
        %v440 = vpop.permute.xlu0 %439
        %441 = vrot.lane.b32.xlu0 %v409, 32
        %v442 = vpop.permute.xlu0 %441
        %443 = vrot.lane.b32.xlu0 %v411, 32
        %v444 = vpop.permute.xlu0 %443
        %445 = vrot.lane.b32.xlu0 %v414, 32
        %v446 = vpop.permute.xlu0 %445
        %447 = vrot.lane.b32.xlu0 %v416, 32
        %v448 = vpop.permute.xlu0 %447
        %vm465 = vcmask 1045504
        %v466 = vrot.slane %v328, 2
        %v467 = vrot.slane %v329, 2
        %v468 = vsel %vm465, %v466, %v467
        %v469 = vrot.slane %v330, 2
        %v470 = vsel %vm465, %v467, %v469
        %v471 = vrot.slane %v331, 2
        %v472 = vrot.slane %v332, 2
        %v473 = vsel %vm465, %v471, %v472
        %v474 = vrot.slane %v333, 2
        %v475 = vsel %vm465, %v472, %v474
        %v476 = vrot.slane %v334, 2
        %v477 = vrot.slane %v335, 2
        %v478 = vsel %vm465, %v476, %v477
        %v479 = vrot.slane %v336, 2
        %v480 = vsel %vm465, %v477, %v479
        %v481 = vrot.slane %v337, 2
        %v482 = vrot.slane %v338, 2
        %v483 = vsel %vm465, %v481, %v482
        %v484 = vrot.slane %v339, 2
        %v485 = vsel %vm465, %v482, %v484
        %v486 = vrot.slane %v340, 2
        %v487 = vrot.slane %v341, 2
        %v488 = vsel %vm465, %v486, %v487
        %v489 = vrot.slane %v342, 2
        %v490 = vsel %vm465, %v487, %v489
        %v491 = vrot.slane %v343, 2
        %v492 = vrot.slane %v344, 2
        %v493 = vsel %vm465, %v491, %v492
        %v494 = vrot.slane %v345, 2
        %v495 = vsel %vm465, %v492, %v494
        %v496 = vrot.slane %v346, 2
        %v497 = vrot.slane %v347, 2
        %v498 = vsel %vm465, %v496, %v497
        %v499 = vrot.slane %v348, 2
        %v500 = vsel %vm465, %v497, %v499
        %v501 = vrot.slane %v349, 2
        %v502 = vrot.slane %v350, 2
        %v503 = vsel %vm465, %v501, %v502
        %v504 = vrot.slane %v351, 2
        %v505 = vsel %vm465, %v502, %v504
        %506 = vrot.lane.b32.xlu0 %v468, 64
        %v507 = vpop.permute.xlu0 %506
        %508 = vrot.lane.b32.xlu0 %v470, 64
        %v509 = vpop.permute.xlu0 %508
        %510 = vrot.lane.b32.xlu0 %v473, 64
        %v511 = vpop.permute.xlu0 %510
        %512 = vrot.lane.b32.xlu0 %v475, 64
        %v513 = vpop.permute.xlu0 %512
        %514 = vrot.lane.b32.xlu0 %v478, 64
        %v515 = vpop.permute.xlu0 %514
        %516 = vrot.lane.b32.xlu0 %v480, 64
        %v517 = vpop.permute.xlu0 %516
        %518 = vrot.lane.b32.xlu0 %v483, 64
        %v519 = vpop.permute.xlu0 %518
        %520 = vrot.lane.b32.xlu0 %v485, 64
        %v521 = vpop.permute.xlu0 %520
        %522 = vrot.lane.b32.xlu0 %v488, 64
        %v523 = vpop.permute.xlu0 %522
        %524 = vrot.lane.b32.xlu0 %v490, 64
        %v525 = vpop.permute.xlu0 %524
        %526 = vrot.lane.b32.xlu0 %v493, 64
        %v527 = vpop.permute.xlu0 %526
        %528 = vrot.lane.b32.xlu0 %v495, 64
        %v529 = vpop.permute.xlu0 %528
        %530 = vrot.lane.b32.xlu0 %v498, 64
        %v531 = vpop.permute.xlu0 %530
        %532 = vrot.lane.b32.xlu0 %v500, 64
        %v533 = vpop.permute.xlu0 %532
        %534 = vrot.lane.b32.xlu0 %v503, 64
        %v535 = vpop.permute.xlu0 %534
        %536 = vrot.lane.b32.xlu0 %v505, 64
        %v537 = vpop.permute.xlu0 %536
        %vm554 = vcmask 1044480
        %v555 = vrot.slane %v328, 3
        %v556 = vrot.slane %v329, 3
        %v557 = vsel %vm554, %v555, %v556
        %v558 = vrot.slane %v330, 3
        %v559 = vsel %vm554, %v556, %v558
        %v560 = vrot.slane %v331, 3
        %v561 = vrot.slane %v332, 3
        %v562 = vsel %vm554, %v560, %v561
        %v563 = vrot.slane %v333, 3
        %v564 = vsel %vm554, %v561, %v563
        %v565 = vrot.slane %v334, 3
        %v566 = vrot.slane %v335, 3
        %v567 = vsel %vm554, %v565, %v566
        %v568 = vrot.slane %v336, 3
        %v569 = vsel %vm554, %v566, %v568
        %v570 = vrot.slane %v337, 3
        %v571 = vrot.slane %v338, 3
        %v572 = vsel %vm554, %v570, %v571
        %v573 = vrot.slane %v339, 3
        %v574 = vsel %vm554, %v571, %v573
        %v575 = vrot.slane %v340, 3
        %v576 = vrot.slane %v341, 3
        %v577 = vsel %vm554, %v575, %v576
        %v578 = vrot.slane %v342, 3
        %v579 = vsel %vm554, %v576, %v578
        %v580 = vrot.slane %v343, 3
        %v581 = vrot.slane %v344, 3
        %v582 = vsel %vm554, %v580, %v581
        %v583 = vrot.slane %v345, 3
        %v584 = vsel %vm554, %v581, %v583
        %v585 = vrot.slane %v346, 3
        %v586 = vrot.slane %v347, 3
        %v587 = vsel %vm554, %v585, %v586
        %v588 = vrot.slane %v348, 3
        %v589 = vsel %vm554, %v586, %v588
        %v590 = vrot.slane %v349, 3
        %v591 = vrot.slane %v350, 3
        %v592 = vsel %vm554, %v590, %v591
        %v593 = vrot.slane %v351, 3
        %v594 = vsel %vm554, %v591, %v593
        %595 = vrot.lane.b32.xlu0 %v557, 96
        %v596 = vpop.permute.xlu0 %595
        %597 = vrot.lane.b32.xlu0 %v559, 96
        %v598 = vpop.permute.xlu0 %597
        %599 = vrot.lane.b32.xlu0 %v562, 96
        %v600 = vpop.permute.xlu0 %599
        %601 = vrot.lane.b32.xlu0 %v564, 96
        %v602 = vpop.permute.xlu0 %601
        %603 = vrot.lane.b32.xlu0 %v567, 96
        %v604 = vpop.permute.xlu0 %603
        %605 = vrot.lane.b32.xlu0 %v569, 96
        %v606 = vpop.permute.xlu0 %605
        %607 = vrot.lane.b32.xlu0 %v572, 96
        %v608 = vpop.permute.xlu0 %607
        %609 = vrot.lane.b32.xlu0 %v574, 96
        %v610 = vpop.permute.xlu0 %609
        %611 = vrot.lane.b32.xlu0 %v577, 96
        %v612 = vpop.permute.xlu0 %611
        %613 = vrot.lane.b32.xlu0 %v579, 96
        %v614 = vpop.permute.xlu0 %613
        %615 = vrot.lane.b32.xlu0 %v582, 96
        %v616 = vpop.permute.xlu0 %615
        %617 = vrot.lane.b32.xlu0 %v584, 96
        %v618 = vpop.permute.xlu0 %617
        %619 = vrot.lane.b32.xlu0 %v587, 96
        %v620 = vpop.permute.xlu0 %619
        %621 = vrot.lane.b32.xlu0 %v589, 96
        %v622 = vpop.permute.xlu0 %621
        %623 = vrot.lane.b32.xlu0 %v592, 96
        %v624 = vpop.permute.xlu0 %623
        %625 = vrot.lane.b32.xlu0 %v594, 96
        %v626 = vpop.permute.xlu0 %625
        %vm643 = vcmask 261120
        %v644 = vsel %vm643, %v328, %v418
        %v645 = vsel %vm643, %v329, %v420
        %v646 = vsel %vm643, %v331, %v422
        %v647 = vsel %vm643, %v332, %v424
        %v648 = vsel %vm643, %v334, %v426
        %v649 = vsel %vm643, %v335, %v428
        %v650 = vsel %vm643, %v337, %v430
        %v651 = vsel %vm643, %v338, %v432
        %v652 = vsel %vm643, %v340, %v434
        %v653 = vsel %vm643, %v341, %v436
        %v654 = vsel %vm643, %v343, %v438
        %v655 = vsel %vm643, %v344, %v440
        %v656 = vsel %vm643, %v346, %v442
        %v657 = vsel %vm643, %v347, %v444
        %v658 = vsel %vm643, %v349, %v446
        %v659 = vsel %vm643, %v350, %v448
        %vm660 = vcmask 523264
        %v661 = vsel %vm660, %v644, %v507
        %v662 = vsel %vm660, %v645, %v509
        %v663 = vsel %vm660, %v646, %v511
        %v664 = vsel %vm660, %v647, %v513
        %v665 = vsel %vm660, %v648, %v515
        %v666 = vsel %vm660, %v649, %v517
        %v667 = vsel %vm660, %v650, %v519
        %v668 = vsel %vm660, %v651, %v521
        %v669 = vsel %vm660, %v652, %v523
        %v670 = vsel %vm660, %v653, %v525
        %v671 = vsel %vm660, %v654, %v527
        %v672 = vsel %vm660, %v655, %v529
        %v673 = vsel %vm660, %v656, %v531
        %v674 = vsel %vm660, %v657, %v533
        %v675 = vsel %vm660, %v658, %v535
        %v676 = vsel %vm660, %v659, %v537
        %vm677 = vcmask 785408
        %v678 = vsel %vm677, %v661, %v596
        %v679 = vsel %vm677, %v662, %v598
        %v680 = vsel %vm677, %v663, %v600
        %v681 = vsel %vm677, %v664, %v602
        %v682 = vsel %vm677, %v665, %v604
        %v683 = vsel %vm677, %v666, %v606
        %v684 = vsel %vm677, %v667, %v608
        %v685 = vsel %vm677, %v668, %v610
        %v686 = vsel %vm677, %v669, %v612
        %v687 = vsel %vm677, %v670, %v614
        %v688 = vsel %vm677, %v671, %v616
        %v689 = vsel %vm677, %v672, %v618
        %v690 = vsel %vm677, %v673, %v620
        %v691 = vsel %vm677, %v674, %v622
        %v692 = vsel %vm677, %v675, %v624
        %v693 = vsel %vm677, %v676, %v626
        %v694 = vld [vmem:[%s1] sm:$0xff]
        %v695 = vld [vmem:[%s1 + $0x8] sm:$0xff]
        %v696 = vld [vmem:[%s1 + $0x10] sm:$0xff]
        %v697 = vld [vmem:[%s1 + $0x18] sm:$0xff]
        %v698 = vld [vmem:[%s1 + $0x20] sm:$0xff]
        %v699 = vld [vmem:[%s1 + $0x28] sm:$0xff]
        %v700 = vld [vmem:[%s1 + $0x30] sm:$0xff]
        %v701 = vld [vmem:[%s1 + $0x38] sm:$0xff]
        %v702 = vld [vmem:[%s1 + $0x40] sm:$0xff]
        %v703 = vld [vmem:[%s1 + $0x48] sm:$0xff]
        %v704 = vld [vmem:[%s1 + $0x50] sm:$0xff]
        %v705 = vld [vmem:[%s1 + $0x58] sm:$0xff]
        %v706 = vld [vmem:[%s1 + $0x60] sm:$0xff]
        %v707 = vld [vmem:[%s1 + $0x68] sm:$0xff]
        %v708 = vld [vmem:[%s1 + $0x70] sm:$0xff]
        %v709 = vld [vmem:[%s1 + $0x78] sm:$0xff]
        %710 = vmatpush.msra.mxu0 %v709
        %711 = vmatpush.msra.mxu0 %v708
        %712 = vmatpush.msra.mxu0 %v707
        %713 = vmatpush.msra.mxu0 %v706
        %714 = vmatpush.msra.mxu0 %v705
        %715 = vmatpush.msra.mxu0 %v704
        %716 = vmatpush.msra.mxu0 %v703
        %717 = vmatpush.msra.mxu0 %v702
        %718 = vmatpush.msra.mxu0 %v701
        %719 = vmatpush.msra.mxu0 %v700
        %720 = vmatpush.msra.mxu0 %v699
        %721 = vmatpush.msra.mxu0 %v698
        %722 = vmatpush.msra.mxu0 %v697
        %723 = vmatpush.msra.mxu0 %v696
        %724 = vmatpush.msra.mxu0 %v695
        %725 = vmatpush.msra.mxu0 %v694
        %726 = vmatmul.f32.gmra.mxu0 %v678
        %v727 = vpop.f32.mrf.mxu0
        %v728 = vadd.f32 0.0, %v727
        %729 = vmatmul.f32.gmra.mxu0 %v679
        %v730 = vpop.f32.mrf.mxu0
        %v731 = vadd.f32 0.0, %v730
        %732 = vmatmul.f32.gmra.mxu0 %v680
        %v733 = vpop.f32.mrf.mxu0
        %v734 = vadd.f32 0.0, %v733
        %735 = vmatmul.f32.gmra.mxu0 %v681
        %v736 = vpop.f32.mrf.mxu0
        %v737 = vadd.f32 0.0, %v736
        %738 = vmatmul.f32.gmra.mxu0 %v682
        %v739 = vpop.f32.mrf.mxu0
        %v740 = vadd.f32 0.0, %v739
        %741 = vmatmul.f32.gmra.mxu0 %v683
        %v742 = vpop.f32.mrf.mxu0
        %v743 = vadd.f32 0.0, %v742
        %744 = vmatmul.f32.gmra.mxu0 %v684
        %v745 = vpop.f32.mrf.mxu0
        %v746 = vadd.f32 0.0, %v745
        %747 = vmatmul.f32.gmra.mxu0 %v685
        %v748 = vpop.f32.mrf.mxu0
        %v749 = vadd.f32 0.0, %v748
        %750 = vmatmul.f32.gmra.mxu0 %v686
        %v751 = vpop.f32.mrf.mxu0
        %v752 = vadd.f32 0.0, %v751
        %753 = vmatmul.f32.gmra.mxu0 %v687
        %v754 = vpop.f32.mrf.mxu0
        %v755 = vadd.f32 0.0, %v754
        %756 = vmatmul.f32.gmra.mxu0 %v688
        %v757 = vpop.f32.mrf.mxu0
        %v758 = vadd.f32 0.0, %v757
        %759 = vmatmul.f32.gmra.mxu0 %v689
        %v760 = vpop.f32.mrf.mxu0
        %v761 = vadd.f32 0.0, %v760
        %762 = vmatmul.f32.gmra.mxu0 %v690
        %v763 = vpop.f32.mrf.mxu0
        %v764 = vadd.f32 0.0, %v763
        %765 = vmatmul.f32.gmra.mxu0 %v691
        %v766 = vpop.f32.mrf.mxu0
        %v767 = vadd.f32 0.0, %v766
        %768 = vmatmul.f32.gmra.mxu0 %v692
        %v769 = vpop.f32.mrf.mxu0
        %v770 = vadd.f32 0.0, %v769
        %771 = vmatmul.f32.gmra.mxu0 %v693
        %v772 = vpop.f32.mrf.mxu0
        %v773 = vadd.f32 0.0, %v772
        %774 = vdwg.mxu0
        %v775 = vld [vmem:[%s2] sm:$0x1]
        %v777 = vperm.slane %v775, 0
        %v779 = vadd.f32 %v728, %v777
        %v780 = vadd.f32 %v731, %v777
        %v781 = vadd.f32 %v734, %v777
        %v782 = vadd.f32 %v737, %v777
        %v783 = vadd.f32 %v740, %v777
        %v784 = vadd.f32 %v743, %v777
        %v785 = vadd.f32 %v746, %v777
        %v786 = vadd.f32 %v749, %v777
        %v787 = vadd.f32 %v752, %v777
        %v788 = vadd.f32 %v755, %v777
        %v789 = vadd.f32 %v758, %v777
        %v790 = vadd.f32 %v761, %v777
        %v791 = vadd.f32 %v764, %v777
        %v792 = vadd.f32 %v767, %v777
        %v793 = vadd.f32 %v770, %v777
        %v794 = vadd.f32 %v773, %v777
        %v795 = vmax.f32 %v779, 0.0
        %v796 = vmax.f32 %v780, 0.0
        %v797 = vmax.f32 %v781, 0.0
        %v798 = vmax.f32 %v782, 0.0
        %v799 = vmax.f32 %v783, 0.0
        %v800 = vmax.f32 %v784, 0.0
        %v801 = vmax.f32 %v785, 0.0
        %v802 = vmax.f32 %v786, 0.0
        %v803 = vmax.f32 %v787, 0.0
        %v804 = vmax.f32 %v788, 0.0
        %v805 = vmax.f32 %v789, 0.0
        %v806 = vmax.f32 %v790, 0.0
        %v807 = vmax.f32 %v791, 0.0
        %v808 = vmax.f32 %v792, 0.0
        %v809 = vmax.f32 %v793, 0.0
        %v810 = vmax.f32 %v794, 0.0
        %v811 = vld [vmem:[%s3] sm:$0xff]
        %v812 = vld [vmem:[%s3 + $0x8] sm:$0xff]
        %v813 = vmul.f32 %v795, %v811
        %v814 = vmul.f32 %v796, %v812
        %v815 = vmul.f32 %v797, %v811
        %v816 = vmul.f32 %v798, %v812
        %v817 = vmul.f32 %v799, %v811
        %v818 = vmul.f32 %v800, %v812
        %v819 = vmul.f32 %v801, %v811
        %v820 = vmul.f32 %v802, %v812
        %v821 = vmul.f32 %v803, %v811
        %v822 = vmul.f32 %v804, %v812
        %v823 = vmul.f32 %v805, %v811
        %v824 = vmul.f32 %v806, %v812
        %v825 = vmul.f32 %v807, %v811
        %v826 = vmul.f32 %v808, %v812
        %v827 = vmul.f32 %v809, %v811
        %v828 = vmul.f32 %v810, %v812
        %vm829 = vcmask 195584
        %v830 = vsel %vm829, %v813, -inf
        %v831 = vsel %vm829, %v814, -inf
        %v832 = vmax.f32 %v830, %v831
        %v833 = vrot.slane %v832, 4
        %v834 = vmax.f32 %v832, %v833
        %v835 = vrot.slane %v834, 2
        %v836 = vmax.f32 %v834, %v835
        %v837 = vrot.slane %v836, 1
        %v838 = vmax.f32 %v836, %v837
        %v839 = vsel %vm829, %v815, -inf
        %v840 = vsel %vm829, %v816, -inf
        %v841 = vmax.f32 %v839, %v840
        %v842 = vrot.slane %v841, 4
        %v843 = vmax.f32 %v841, %v842
        %v844 = vrot.slane %v843, 2
        %v845 = vmax.f32 %v843, %v844
        %v846 = vrot.slane %v845, 1
        %v847 = vmax.f32 %v845, %v846
        %v848 = vsel %vm829, %v817, -inf
        %v849 = vsel %vm829, %v818, -inf
        %v850 = vmax.f32 %v848, %v849
        %v851 = vrot.slane %v850, 4
        %v852 = vmax.f32 %v850, %v851
        %v853 = vrot.slane %v852, 2
        %v854 = vmax.f32 %v852, %v853
        %v855 = vrot.slane %v854, 1
        %v856 = vmax.f32 %v854, %v855
        %v857 = vsel %vm829, %v819, -inf
        %v858 = vsel %vm829, %v820, -inf
        %v859 = vmax.f32 %v857, %v858
        %v860 = vrot.slane %v859, 4
        %v861 = vmax.f32 %v859, %v860
        %v862 = vrot.slane %v861, 2
        %v863 = vmax.f32 %v861, %v862
        %v864 = vrot.slane %v863, 1
        %v865 = vmax.f32 %v863, %v864
        %v866 = vsel %vm829, %v821, -inf
        %v867 = vsel %vm829, %v822, -inf
        %v868 = vmax.f32 %v866, %v867
        %v869 = vrot.slane %v868, 4
        %v870 = vmax.f32 %v868, %v869
        %v871 = vrot.slane %v870, 2
        %v872 = vmax.f32 %v870, %v871
        %v873 = vrot.slane %v872, 1
        %v874 = vmax.f32 %v872, %v873
        %v875 = vsel %vm829, %v823, -inf
        %v876 = vsel %vm829, %v824, -inf
        %v877 = vmax.f32 %v875, %v876
        %v878 = vrot.slane %v877, 4
        %v879 = vmax.f32 %v877, %v878
        %v880 = vrot.slane %v879, 2
        %v881 = vmax.f32 %v879, %v880
        %v882 = vrot.slane %v881, 1
        %v883 = vmax.f32 %v881, %v882
        %v884 = vsel %vm829, %v825, -inf
        %v885 = vsel %vm829, %v826, -inf
        %v886 = vmax.f32 %v884, %v885
        %v887 = vrot.slane %v886, 4
        %v888 = vmax.f32 %v886, %v887
        %v889 = vrot.slane %v888, 2
        %v890 = vmax.f32 %v888, %v889
        %v891 = vrot.slane %v890, 1
        %v892 = vmax.f32 %v890, %v891
        %v893 = vsel %vm829, %v827, -inf
        %v894 = vsel %vm829, %v828, -inf
        %v895 = vmax.f32 %v893, %v894
        %v896 = vrot.slane %v895, 4
        %v897 = vmax.f32 %v895, %v896
        %v898 = vrot.slane %v897, 2
        %v899 = vmax.f32 %v897, %v898
        %v900 = vrot.slane %v899, 1
        %v901 = vmax.f32 %v899, %v900
        %v902 = vld [vmem:[%s4] sm:$0xff]
        %v903 = vld [vmem:[%s4 + $0x8] sm:$0xff]
        %v904 = vld [vmem:[%s4 + $0x10] sm:$0xff]
        %v905 = vld [vmem:[%s5] sm:$0x1]
        %v907 = vperm.slane %v905, 0
        %vm917 = vcmask 1041409
        %v918 = vsel %vm917, %v847, %v838
        %vm919 = vcmask 1042434
        %v920 = vsel %vm919, %v856, %v918
        %vm921 = vcmask 1043459
        %v922 = vsel %vm921, %v865, %v920
        %vm923 = vcmask 1044484
        %v924 = vsel %vm923, %v874, %v922
        %vm925 = vcmask 1045509
        %v926 = vsel %vm925, %v883, %v924
        %vm927 = vcmask 1046534
        %v928 = vsel %vm927, %v892, %v926
        %vm929 = vcmask 1047559
        %v930 = vsel %vm929, %v901, %v928
        %v931 = vsel %vm829, %v930, 0
        %933 = vmatpush.msra.mxu0 0.0
        %934 = vmatpush.msra.mxu0 0.0
        %935 = vmatpush.msra.mxu0 0.0
        %936 = vmatpush.msra.mxu0 0.0
        %937 = vmatpush.msra.mxu0 0.0
        %938 = vmatpush.msra.mxu0 0.0
        %939 = vmatpush.msra.mxu0 0.0
        %940 = vmatpush.msra.mxu0 0.0
        %941 = vmatpush.msra.mxu0 0.0
        %942 = vmatpush.msra.mxu0 0.0
        %943 = vmatpush.msra.mxu0 0.0
        %944 = vmatpush.msra.mxu0 0.0
        %945 = vmatpush.msra.mxu0 0.0
        %946 = vmatpush.msra.mxu0 %v904
        %947 = vmatpush.msra.mxu0 %v903
        %948 = vmatpush.msra.mxu0 %v902
        %949 = vmatmul.f32.gmra.mxu0 %v931
        %v950 = vpop.f32.mrf.mxu0
        %v951 = vadd.f32 %v907, %v950
        %952 = vdwg.mxu0
        %v953 = vmax.f32 %v951, 0.0
        %v954 = vld [vmem:[%s6] sm:$0xff]
        %v955 = vld [vmem:[%s6 + $0x8] sm:$0xff]
        %v956 = vld [vmem:[%s6 + $0x10] sm:$0xff]
        %v957 = vld [vmem:[%s6 + $0x18] sm:$0xff]
        %v958 = vld [vmem:[%s7] sm:$0x1]
        %v960 = vperm.slane %v958, 0
        %v963 = vsel %vm643, %v953, 0
        %965 = vmatpush.msra.mxu0 0.0
        %966 = vmatpush.msra.mxu0 0.0
        %967 = vmatpush.msra.mxu0 0.0
        %968 = vmatpush.msra.mxu0 0.0
        %969 = vmatpush.msra.mxu0 0.0
        %970 = vmatpush.msra.mxu0 0.0
        %971 = vmatpush.msra.mxu0 0.0
        %972 = vmatpush.msra.mxu0 0.0
        %973 = vmatpush.msra.mxu0 0.0
        %974 = vmatpush.msra.mxu0 0.0
        %975 = vmatpush.msra.mxu0 0.0
        %976 = vmatpush.msra.mxu0 0.0
        %977 = vmatpush.msra.mxu0 %v957
        %978 = vmatpush.msra.mxu0 %v956
        %979 = vmatpush.msra.mxu0 %v955
        %980 = vmatpush.msra.mxu0 %v954
        %981 = vmatmul.f32.gmra.mxu0 %v963
        %v982 = vpop.f32.mrf.mxu0
        %v983 = vadd.f32 %v960, %v982
        %984 = vdwg.mxu0
        %vm985 = vcmask 31744
        %986 = vst.msk [vmem:[%s327] sm:$0xff] %vm985, %v983
        %p987 = scmp.lt.s32.totalorder %s22, 1
        %s988 = scalar_select %p987, %s22, 1
        %s989 = smul.addr %s988, 8
        %s990 = scalar_lea.vmem %s8, %s989
        // Predicated region
        $region57: #{tpu_custom_call.1} parent=51 // pred_check
          %p991 = pneg %p213
        $region58: #{tpu_custom_call.1} parent=51 // pred_check_branch
          %993 = sbr.rel (%p991) target = $region60
        $region59: #{tpu_custom_call.1} parent=51 // pred_region
          _
        $region60: #{tpu_custom_call.1} parent=51 // pred_fallthru
          _
      $region52: #{tpu_custom_call.1} parent=5 // pred_fallthru
        _
      %p994 = scmp.le.s32.totalorder 2, %s17
      // Predicated region
      $region61: #{tpu_custom_call.1} parent=5 // pred_check
        %p995 = pneg %p994
      $region62: #{tpu_custom_call.1} parent=5 // pred_check_branch
        %997 = sbr.rel (%p995) target = $region64
      $region63: #{tpu_custom_call.1} parent=5 // pred_region
        %s998 = ssub.s32 %s17, 2
        // Predicated region
        $region65: #{tpu_custom_call.1} parent=63 // pred_check
          %p999 = pneg %p219
        $region66: #{tpu_custom_call.1} parent=63 // pred_check_branch
          %1001 = sbr.rel (%p999) target = $region68
        $region67: #{tpu_custom_call.1} parent=63 // pred_region
          %p1002 = scmp.lt.s32.totalorder %s23, 1
          %s1003 = scalar_select %p1002, %s23, 1
          %s1004 = smul.addr %s1003, 8
          %s1005 = scalar_lea.vmem %s8, %s1004
        $region68: #{tpu_custom_call.1} parent=63 // pred_fallthru
          _
      $region64: #{tpu_custom_call.1} parent=5 // pred_fallthru
        _
    $region6: #{tpu_custom_call.1} parent=1 // loop_footer
      %s21 = sadd.s32 1, %s17
    $region7: #{tpu_custom_call.1} parent=1 // loop_footer_branch
      %16 = sbr.rel target = $region3
    $region8: #{tpu_custom_call.1} parent=1 // loop_exit
      _
    %1006 = vsyncpa [#allocation3], 1
    %s1007 = scalar_lea.sflag [#allocation3], 1
    %1008 = vsyncpa %s1007, 1

</llo_original>
